<compile_context>
chip_gen: v7x
topology: tpu7x:2x2x1
jax: 0.10.0
libtpu: 0.0.40
codegen_flags: <defaults>
</compile_context>

<pallas_src>
import functools

import jax
import jax.numpy as jnp
from jax.experimental import pallas as pl
from jax.experimental.pallas import tpu as pltpu

_LANE = 128
_SINGLE_BLOCK_BYTES = 2 * 1024 * 1024  # Path-A cutoff: below this, skip pipelining.


def _round_up(n, m):
    return ((n + m - 1) // m) * m


def _round_down(n, m):
    return (n // m) * m


def _sublane(dtype):
    return {4: 8, 2: 16, 1: 32}.get(jnp.dtype(dtype).itemsize, 8)


def _chip_budgets():
    """(block_budget_bytes, vmem_limit_bytes) sized per TPU generation."""
    try:
        vmem_bytes = int(pltpu.get_tpu_info().vmem_capacity_bytes)
    except Exception:
        vmem_bytes = 64 * 1024 * 1024  # conservative (v7x-sized) fallback
    if vmem_bytes >= 128 * 1024 * 1024:
        # v5e / v6e: 128 MiB physical VMEM -> bigger blocks, fewer grid steps.
        return 24 * 1024 * 1024, 80 * 1024 * 1024
    # v7x: 64 MiB physical (32 MiB scoped default) -> keep 2x-buffered blocks tight.
    return 10 * 1024 * 1024, 32 * 1024 * 1024


def _nce_kernel(x_ref, o_ref, *, scale):
    # In-kernel f32 cast (input travels HBM->VMEM in its native dtype), EUP
    # log, lane-wise batch reduce, single precomputed (-1/B) VPU multiply.
    x = x_ref[...].astype(jnp.float32)
    o_ref[...] = jnp.sum(jnp.log(x), axis=0, keepdims=True) * scale


def _nce_kernel_batch_tiled(x_ref, o_ref, acc_ref, *, scale, batch, tile_b, mask_rows):
    # Batch is the trailing "arbitrary" reduction axis; accumulate in f32 VMEM.
    # (With a "parallel" K axis each TensorCore gets its own scratch copy.)
    bi = pl.program_id(1)

    @pl.when(bi == 0)
    def _():
        acc_ref[...] = jnp.zeros_like(acc_ref)

    x = x_ref[...].astype(jnp.float32)
    if mask_rows:
        # Ragged last batch tile: out-of-bounds rows hold garbage (no wrapper
        # pad) -> force them to 1.0 so log() contributes exactly 0.
        row = jax.lax.broadcasted_iota(jnp.int32, x.shape, 0) + bi * tile_b
        x = jnp.where(row < batch, x, jnp.float32(1.0))
    acc_ref[...] += jnp.sum(jnp.log(x), axis=0, keepdims=True)

    @pl.when(bi == pl.num_programs(1) - 1)
    def _():
        o_ref[...] = acc_ref[...] * scale


def nce_criterion(x, targets=None, *, block_budget_bytes=None,
                  vmem_limit_bytes=None, single_block_bytes=_SINGLE_BLOCK_BYTES):
    """loss = -sum(log(x), axis=0) / B, returned with shape (K,) in f32."""
    del targets  # unused, matches the PyTorch module
    B, K = x.shape
    default_budget, default_vmem = _chip_budgets()
    if block_budget_bytes is None:
        block_budget_bytes = default_budget
    if vmem_limit_bytes is None:
        vmem_limit_bytes = default_vmem
    itemsize = jnp.dtype(x.dtype).itemsize
    scale = -1.0 / B  # plain Python float -> compile-time immediate in the kernel

    def cparams(dims=None):
        if dims is None:
            return pltpu.CompilerParams(vmem_limit_bytes=vmem_limit_bytes)
        return pltpu.CompilerParams(dimension_semantics=dims,
                                    vmem_limit_bytes=vmem_limit_bytes)

    # ---- Path A: tiny input -> one resident VMEM block, no grid, no double
    # buffering (whole array copied to VMEM once). ----------------------------
    if B * K * itemsize <= min(single_block_bytes, block_budget_bytes):
        out = pl.pallas_call(
            functools.partial(_nce_kernel, scale=scale),
            out_shape=jax.ShapeDtypeStruct((1, K), jnp.float32),
            in_specs=[pl.BlockSpec(memory_space=pltpu.MemorySpace.VMEM)],
            out_specs=pl.BlockSpec(memory_space=pltpu.MemorySpace.VMEM),
            compiler_params=cparams(),
        )(x)
        return out.reshape(K)

    # ---- Path B: full batch per block, large lane-dense K tiles on a
    # "parallel" cdiv grid (ragged last tile's garbage lanes are clipped on
    # writeback, so no padding / masking is needed). --------------------------
    if K >= _LANE and B * _LANE * itemsize <= block_budget_bytes:
        tile_k = _round_down(block_budget_bytes // (B * itemsize), _LANE)
        tile_k = max(_LANE, min(tile_k, _round_down(K, _LANE)))
        # Aim for >=4 grid steps (or K//128 if fewer possible): keeps both v7x
        # TCs busy and gives single-TC chips real DMA/compute overlap.
        steps_target = min(4, K // _LANE)
        if steps_target >= 2:
            tile_k = min(tile_k, max(_LANE, _round_down(K // steps_target, _LANE)))
        grid_k = pl.cdiv(K, tile_k)
        out = pl.pallas_call(
            functools.partial(_nce_kernel, scale=scale),
            out_shape=jax.ShapeDtypeStruct((1, K), jnp.float32),
            grid_spec=pltpu.PrefetchScalarGridSpec(
                num_scalar_prefetch=0,
                grid=(grid_k,),
                in_specs=[pl.BlockSpec((B, tile_k), lambda j: (0, j))],
                out_specs=pl.BlockSpec((1, tile_k), lambda j: (0, j)),
            ),
            compiler_params=cparams(("parallel",)),
        )(x)
        return out.reshape(K)

    # ---- Path C: very large batch -> tile B as a trailing "arbitrary"
    # accumulation axis (f32 VMEM scratch); K stays "parallel". Ragged last
    # B tile is masked in-kernel; ragged K lanes are clipped on writeback. ----
    sub = _sublane(x.dtype)
    if K >= _LANE:
        tile_k = min(_round_down(K, _LANE), 2048)  # up to 8 KiB contiguous f32 per row DMA
    else:
        tile_k = K  # short lane dim: block == full array dim (allowed)
    tile_b = _round_down(max(sub, block_budget_bytes // (tile_k * itemsize)), sub)
    if B >= sub:
        tile_b = max(sub, min(tile_b, _round_down(B, sub)))
    else:
        tile_b = B
    grid_k = pl.cdiv(K, tile_k)
    grid_b = pl.cdiv(B, tile_b)
    mask_rows = (B % tile_b) != 0
    out = pl.pallas_call(
        functools.partial(_nce_kernel_batch_tiled, scale=scale, batch=B,
                          tile_b=tile_b, mask_rows=mask_rows),
        out_shape=jax.ShapeDtypeStruct((1, K), jnp.float32),
        grid_spec=pltpu.PrefetchScalarGridSpec(
            num_scalar_prefetch=0,
            grid=(grid_k, grid_b),
            in_specs=[pl.BlockSpec((tile_b, tile_k), lambda kj, bi: (bi, kj))],
            out_specs=pl.BlockSpec((1, tile_k), lambda kj, bi: (0, kj)),
            scratch_shapes=[pltpu.VMEM((1, tile_k), jnp.float32)],
        ),
        compiler_params=cparams(("parallel", "arbitrary")),
    )(x)
    return out.reshape(K)


if __name__ == "__main__":
    key = jax.random.PRNGKey(0)
    k1, k2, k3 = jax.random.split(key, 3)

    # --- main check: f32 probabilities, tiny input -> grid-less Path A ------
    B, K = 16, 256
    x = jax.random.uniform(k1, (B, K), dtype=jnp.float32, minval=1e-3, maxval=1.0)
    targets = jax.random.randint(k2, (B,), 0, K)  # unused, for API parity

    loss = jax.block_until_ready(nce_criterion(x, targets))
    ref = -jnp.sum(jnp.log(x), axis=0) / B
    assert loss.shape == (K,)
    assert jnp.allclose(loss, ref, rtol=1e-5, atol=1e-5)

    # --- exercise Path B: native bf16 on the wire, odd K (cdiv grid, no pad) -
    B2, K2 = 16, 389
    x2 = jax.random.uniform(k2, (B2, K2), dtype=jnp.float32,
                            minval=1e-2, maxval=1.0).astype(jnp.bfloat16)
    loss2 = jax.block_until_ready(
        nce_criterion(x2, None, block_budget_bytes=8 * 1024))
    ref2 = -jnp.sum(jnp.log(x2.astype(jnp.float32)), axis=0) / B2
    assert loss2.shape == (K2,)
    assert jnp.allclose(loss2, ref2, rtol=1e-5, atol=1e-5)

    # --- exercise Path C: B accumulation with in-kernel ragged-row masking ---
    B3, K3 = 20, 200
    x3 = jax.random.uniform(k3, (B3, K3), dtype=jnp.float32,
                            minval=1e-3, maxval=1.0)
    loss3 = jax.block_until_ready(
        nce_criterion(x3, None, block_budget_bytes=1024))
    ref3 = -jnp.sum(jnp.log(x3), axis=0) / B3
    assert loss3.shape == (K3,)
    assert jnp.allclose(loss3, ref3, rtol=1e-5, atol=1e-5)

    print("KERNEL_OK")
</pallas_src>

<mosaic_0001>
module attributes {stable_mosaic.version = 11 : i64} {
  func.func @_nce_kernel(%arg0: memref<16x256xf32, #tpu.memory_space<vmem>>, %arg1: memref<1x256xf32, #tpu.memory_space<vmem>>) attributes {dimension_semantics = [], scalar_prefetch = 0 : i64, scratch_operands = 0 : i64, tpu.core_type = #tpu.core_type<tc>} {
    %c0 = arith.constant 0 : index
    %c0_0 = arith.constant 0 : index
    %0 = vector.load %arg0[%c0, %c0_0] : memref<16x256xf32, #tpu.memory_space<vmem>>, vector<16x256xf32>
    %1 = math.log %0 : vector<16x256xf32>
    %cst = arith.constant dense<0.000000e+00> : vector<256xf32>
    %2 = vector.multi_reduction <add>, %1, %cst [0] : vector<16x256xf32> to vector<256xf32>
    %3 = vector.shape_cast %2 : vector<256xf32> to vector<1x256xf32>
    %cst_1 = arith.constant -6.250000e-02 : f32
    %4 = vector.broadcast %cst_1 : f32 to vector<1x256xf32>
    %5 = arith.mulf %3, %4 : vector<1x256xf32>
    %c0_2 = arith.constant 0 : index
    %c0_3 = arith.constant 0 : index
    %6 = vector.load %arg1[%c0_2, %c0_3] : memref<1x256xf32, #tpu.memory_space<vmem>>, vector<1x256xf32>
    tpu.vector_store %arg1[%c0_2, %c0_3], %5 {strides = array<i32>} : memref<1x256xf32, #tpu.memory_space<vmem>>, vector<1x256xf32>,
    return
  }
}

</mosaic_0001>

<llo_original>
// kernel: tpu_custom_call.1
$region0: #{tpu_custom_call.1}
  #allocation0 [shape = 'u32[]', space=smem, size = 0x4, offset = 0x4, fixed_abs, tag = 'smem constant byte address 0x4 - core index']
  #allocation1 [shape = 'u32[144,128]{1,0:T(1,128)}', space=vmem, size = 0x12000, scoped, tag = 'internal scratch']
  %s0 = inlined_call_operand.hbm [shape: f32[16,256], index: 0, kind: input, shape index: {}]
  %s1 = inlined_call_operand.hbm [shape: f32[1,256], index: 1, kind: output, shape index: {}]
  %s2 = sld [smem:[#allocation0]]
  $region18: #{tpu_custom_call.1} parent=0
    _
  %s4 = ssub.s32 1, %s2
  %s5 = scalar_select 0, %s4, %s2
  $region1: #{tpu_custom_call.1} parent=0
    #allocation2 [shape = 'u8[16384]{0}', space=vmem, size = 0x4000, scoped, tag = 'input window, operand 0, single buffered']
    #allocation3 [shape = 's32[1]{0}', space=sflag, size = 0x4, scoped, tag = 'scoped memory for tpu_custom_call.1']
    #allocation4 [shape = 's32[1]{0}', space=sflag, size = 0x4, scoped, tag = 'scoped memory for tpu_custom_call.1']
    #allocation5 [shape = 'u8[1024]{0}', space=vmem, size = 0x400, scoped, tag = 'output window, operand 0, single buffered']
    %6 = vsyncpa [#allocation3], 0
    %7 = vsyncpa [#allocation4], 0
    // Predicated region
    $region2: #{tpu_custom_call.1} parent=1 // pred_check
      _
    $region3: #{tpu_custom_call.1} parent=1 // pred_check_branch
      %9 = sbr.rel (0) target = $region5
    $region4: #{tpu_custom_call.1} parent=1 // pred_region
      %s11 = ssub.s32 512, 512
      %12 = vsyncadd [#allocation3], %s11
      %s13 = sshll.u32 [#allocation2], 4
      %s14 = int_to_ptr.vmem [resolvable:$true] %s13
      %19 = dma.hbm_to_vmem [thread:$0]  %s0, 512, %s14, [#allocation3], 256, 256, 16
    $region5: #{tpu_custom_call.1} parent=1 // pred_fallthru
      _
    // Predicated region
    $region6: #{tpu_custom_call.1} parent=1 // pred_check
      _
    $region7: #{tpu_custom_call.1} parent=1 // pred_check_branch
      %21 = sbr.rel (0) target = $region9
    $region8: #{tpu_custom_call.1} parent=1 // pred_region
      %22 = dma.done [#allocation3], 512
    $region9: #{tpu_custom_call.1} parent=1 // pred_fallthru
      _
    %v23 = vld [vmem:[#allocation2] sm:$0xff]
    %v24 = vld [vmem:[#allocation2 + $0x8] sm:$0xff]
    %v25 = vld [vmem:[#allocation2 + $0x10] sm:$0xff]
    %v26 = vld [vmem:[#allocation2 + $0x18] sm:$0xff]
    %v27 = vlog2.pop %v23
    %v28 = vmul.f32 %v27, 0.6931472
    %v29 = vlog2.pop %v24
    %v30 = vmul.f32 %v29, 0.6931472
    %v31 = vlog2.pop %v25
    %v32 = vmul.f32 %v31, 0.6931472
    %v33 = vlog2.pop %v26
    %v34 = vmul.f32 %v33, 0.6931472
    %v35 = vadd.f32 %v28, %v32
    %v36 = vrot.slane %v35, 4
    %v37 = vadd.f32 %v35, %v36
    %v38 = vrot.slane %v37, 2
    %v39 = vadd.f32 %v37, %v38
    %v40 = vrot.slane %v39, 1
    %v41 = vadd.f32 %v39, %v40
    %v42 = vadd.f32 %v30, %v34
    %v43 = vrot.slane %v42, 4
    %v44 = vadd.f32 %v42, %v43
    %v45 = vrot.slane %v44, 2
    %v46 = vadd.f32 %v44, %v45
    %v47 = vrot.slane %v46, 1
    %v48 = vadd.f32 %v46, %v47
    %v49 = vmul.f32 %v41, -0.0625
    %v50 = vmul.f32 %v48, -0.0625
    %v53 = vcombine.low %v49, %v50
    %v55 = vunpack.c.l.s4 1966171168
    %v56 = vunpack.c.0.s8 %v55
    %v57 = vlaneseq
    %v58 = vshrl.u32 %v57, 7
    %v59 = vsub.s32 %v56, %v58
    %v60 = vrot.slane %v53, %v59
    %v62 = vunpack.c.l.s4 1966171168
    %v63 = vunpack.c.0.s8 %v62
    %v64 = vlaneseq
    %v65 = vshrl.u32 %v64, 7
    %v66 = vsub.s32 %v63, %v65
    %v67 = vrot.slane %v60, %v66
    %v69 = vlaneseq
    %vm70 = vcmp.ge.s32.totalorder %v69, 0
    %vm71 = vcmp.lt.s32.totalorder %v69, 256
    %vm72 = vmand %vm70, %vm71
    %73 = vst.msk [vmem:[#allocation5] sm:$0x3] %vm72, %v67
    // Predicated region
    $region10: #{tpu_custom_call.1} parent=1 // pred_check
      _
    $region11: #{tpu_custom_call.1} parent=1 // pred_check_branch
      %75 = sbr.rel (0) target = $region13
    $region12: #{tpu_custom_call.1} parent=1 // pred_region
      %s77 = ssub.s32 32, 32
      %78 = vsyncadd [#allocation4], %s77
      %s80 = sshll.u32 [#allocation5], 4
      %s81 = int_to_ptr.vmem [resolvable:$true] %s80
      %83 = dma.vmem_to_hbm [thread:$0]  %s81, 32, %s1, [#allocation4]
    $region13: #{tpu_custom_call.1} parent=1 // pred_fallthru
      _
    // Predicated region
    $region14: #{tpu_custom_call.1} parent=1 // pred_check
      _
    $region15: #{tpu_custom_call.1} parent=1 // pred_check_branch
      %85 = sbr.rel (0) target = $region17
    $region16: #{tpu_custom_call.1} parent=1 // pred_region
      %86 = dma.done [#allocation4], 32
    $region17: #{tpu_custom_call.1} parent=1 // pred_fallthru
      _
    %87 = vsyncpa [#allocation3], 1
    %88 = vsyncpa [#allocation4], 1

</llo_original>
